<compile_context>
chip_gen: v5e
topology: v5e:2x2
jax: 0.10.0
libtpu: 0.0.40
codegen_flags: <defaults>
</compile_context>

<pallas_src>
import jax
import jax.numpy as jnp
from jax.experimental import pallas as pl
from jax.experimental.pallas import tpu as pltpu


LN_EPS = 1e-5  # nn.LayerNorm default


def _round_up(x, m):
    return (x + m - 1) // m * m


def _layernorm_affine(h, gamma, beta):
    # biased variance over last dim (matches F.layer_norm), f32 throughout
    mean = jnp.mean(h, axis=-1, keepdims=True)
    var = jnp.mean((h - mean) ** 2, axis=-1, keepdims=True)
    hn = (h - mean) * jax.lax.rsqrt(var + LN_EPS)
    return hn * gamma + beta


def actor_kernel(
    # batch-tiled inputs
    obs_ref, z_ref,
    # embed_z params (first layer split into obs / z row-halves)
    wz1o_ref, wz1z_ref, bz1_ref, gz_ref, betaz_ref, wz2_ref, bz2_ref,
    # embed_s params
    ws1_ref, bs1_ref, gs_ref, betas_ref, ws2_ref, bs2_ref,
    # policy params (Linear_p1 split into s_emb / z_emb halves, padded Linear_p2)
    wp1_s_ref, wp1_z_ref, bp1_ref, wp2_ref, bp2_ref,
    # output (lane-dense, padded action dim)
    mu_ref,
):
    f32 = jnp.float32
    bf16 = jnp.bfloat16

    obs_bf = obs_ref[...].astype(bf16)   # (TB, obs_dim)
    z_bf = z_ref[...].astype(bf16)       # (TB, z_dim)

    # ---- embed_z: Linear(obs+z -> H) as split matmul, LayerNorm, Tanh, Linear(H -> H//2), ReLU
    hz = (jnp.dot(obs_bf, wz1o_ref[...], preferred_element_type=f32)
          + jnp.dot(z_bf, wz1z_ref[...], preferred_element_type=f32)
          + bz1_ref[...])
    hz = jnp.tanh(_layernorm_affine(hz, gz_ref[...], betaz_ref[...]))
    z_emb = jnp.maximum(
        jnp.dot(hz.astype(bf16), wz2_ref[...], preferred_element_type=f32)
        + bz2_ref[...], 0.0)

    # ---- embed_s: Linear(obs -> H), LayerNorm, Tanh, Linear(H -> H//2), ReLU
    hs = jnp.dot(obs_bf, ws1_ref[...], preferred_element_type=f32) + bs1_ref[...]
    hs = jnp.tanh(_layernorm_affine(hs, gs_ref[...], betas_ref[...]))
    s_emb = jnp.maximum(
        jnp.dot(hs.astype(bf16), ws2_ref[...], preferred_element_type=f32)
        + bs2_ref[...], 0.0)

    # ---- policy on cat([s_emb, z_emb], -1): Linear(H -> H), ReLU, Linear(H -> A_pad), tanh
    # cat(a,b) @ W == a @ W_top + b @ W_bot  (no in-kernel concat)
    hp = (jnp.dot(s_emb.astype(bf16), wp1_s_ref[...], preferred_element_type=f32)
          + jnp.dot(z_emb.astype(bf16), wp1_z_ref[...], preferred_element_type=f32)
          + bp1_ref[...])
    hp = jnp.maximum(hp, 0.0)
    mu = jnp.tanh(
        jnp.dot(hp.astype(bf16), wp2_ref[...], preferred_element_type=f32)
        + bp2_ref[...])

    mu_ref[...] = mu


def actor_forward(obs, z, std_scalar, params, *, tile_b=1024):
    """Returns (mu, std) of the TruncatedNormal the PyTorch Actor would build."""
    B, OBS = obs.shape
    ZD = z.shape[1]
    H = params["wz1"].shape[1]
    half = H // 2
    A = params["wp2"].shape[1]
    Ap = _round_up(A, 128)          # lane-dense output width

    # --- batch tile: multiple of 8 sublanes, <= tile_b, and capped at ceil(B/2)
    #     so the grid has >=2 steps (lets "parallel" shard across v7x's 2 TCs).
    TB = _round_up(max(min(tile_b, B), 8), 8)
    if B > 8:
        TB = min(TB, _round_up(pl.cdiv(B, 2), 8))
    Bp = _round_up(B, TB)

    if Bp != B:
        pad = Bp - B
        obs_p = jnp.pad(obs, ((0, pad), (0, 0)))
        z_p = jnp.pad(z, ((0, pad), (0, 0)))
    else:
        obs_p, z_p = obs, z

    # --- one-time weight prep (bf16 cast, row-splits, lane-dense padding).
    #     In production hoist this out of the per-step path / jit it with the params.
    bf = jnp.bfloat16
    wz1o = params["wz1"][:OBS].astype(bf)
    wz1z = params["wz1"][OBS:].astype(bf)
    wz2 = params["wz2"].astype(bf)
    ws1 = params["ws1"].astype(bf)
    ws2 = params["ws2"].astype(bf)
    wp1_s = params["wp1"][:half].astype(bf)
    wp1_z = params["wp1"][half:].astype(bf)
    wp2_p = jnp.zeros((H, Ap), bf).at[:, :A].set(params["wp2"].astype(bf))
    bp2_p = jnp.zeros((1, Ap), jnp.float32).at[:, :A].set(params["bp2"])

    weight_inputs = (
        wz1o, wz1z, params["bz1"], params["gz"], params["betaz"], wz2, params["bz2"],
        ws1, params["bs1"], params["gs"], params["betas"], ws2, params["bs2"],
        wp1_s, wp1_z, params["bp1"], wp2_p, bp2_p,
    )

    def batch_spec(feat):
        return pl.BlockSpec((TB, feat), lambda i: (i, 0))

    def const_spec(arr):
        # weights/biases: same block every grid step -> stay VMEM-resident
        return pl.BlockSpec(arr.shape, lambda i: (0, 0))

    in_specs = ([batch_spec(OBS), batch_spec(ZD)]
                + [const_spec(w) for w in weight_inputs])

    mu_p = pl.pallas_call(
        actor_kernel,
        grid=(Bp // TB,),
        out_shape=jax.ShapeDtypeStruct((Bp, Ap), jnp.float32),
        in_specs=in_specs,
        out_specs=pl.BlockSpec((TB, Ap), lambda i: (i, 0)),
        compiler_params=pltpu.CompilerParams(
            dimension_semantics=("parallel",),        # megacore sharding on v7x
            vmem_limit_bytes=48 * 1024 * 1024,        # > scoped default, < v7x 64 MiB
        ),
    )(obs_p, z_p, *weight_inputs)

    mu = mu_p[:B, :A]
    # std is a broadcast constant -> produced in the wrapper, not written by the kernel.
    std = jnp.full((B, A), std_scalar, dtype=jnp.float32)
    return mu, std


def init_params(key, obs_dim, z_dim, hidden_dim, action_dim):
    """Deterministic synthetic f32 parameters (shapes match the PyTorch module)."""
    half = hidden_dim // 2
    ks = jax.random.split(key, 12)

    def w(k, shape, fan_in):
        return (jax.random.normal(k, shape, jnp.float32) / jnp.sqrt(fan_in)).astype(jnp.float32)

    return dict(
        wz1=w(ks[0], (obs_dim + z_dim, hidden_dim), obs_dim + z_dim),
        bz1=w(ks[1], (1, hidden_dim), obs_dim + z_dim),
        gz=jnp.ones((1, hidden_dim), jnp.float32),
        betaz=jnp.zeros((1, hidden_dim), jnp.float32),
        wz2=w(ks[2], (hidden_dim, half), hidden_dim),
        bz2=w(ks[3], (1, half), hidden_dim),
        ws1=w(ks[4], (obs_dim, hidden_dim), obs_dim),
        bs1=w(ks[5], (1, hidden_dim), obs_dim),
        gs=jnp.ones((1, hidden_dim), jnp.float32),
        betas=jnp.zeros((1, hidden_dim), jnp.float32),
        ws2=w(ks[6], (hidden_dim, half), hidden_dim),
        bs2=w(ks[7], (1, half), hidden_dim),
        wp1=w(ks[8], (hidden_dim, hidden_dim), hidden_dim),
        bp1=w(ks[9], (1, hidden_dim), hidden_dim),
        wp2=w(ks[10], (hidden_dim, action_dim), hidden_dim),
        bp2=w(ks[11], (1, action_dim), hidden_dim),
    )


def actor_forward_ref(obs, z, std_scalar, p):
    """Pure-JAX f32 reference of the PyTorch forward for correctness checking."""
    def ln(h):
        m = jnp.mean(h, -1, keepdims=True)
        v = jnp.mean((h - m) ** 2, -1, keepdims=True)
        return (h - m) / jnp.sqrt(v + LN_EPS)

    xz = jnp.concatenate([obs, z], -1)
    hz = jnp.tanh(ln(xz @ p["wz1"] + p["bz1"]) * p["gz"] + p["betaz"])
    z_emb = jax.nn.relu(hz @ p["wz2"] + p["bz2"])

    hs = jnp.tanh(ln(obs @ p["ws1"] + p["bs1"]) * p["gs"] + p["betas"])
    s_emb = jax.nn.relu(hs @ p["ws2"] + p["bs2"])

    emb = jnp.concatenate([s_emb, z_emb], -1)
    h = jax.nn.relu(emb @ p["wp1"] + p["bp1"])
    mu = jnp.tanh(h @ p["wp2"] + p["bp2"])
    return mu, jnp.ones_like(mu) * std_scalar


# TODO(synk): TruncatedNormal sampling / clamping (dist.sample) is host-side
# distribution logic, not part of the module's forward math; the kernel returns
# the (mu, std) that parameterize it.


if __name__ == "__main__":
    # Small shapes consistent with the module's forward.
    B, OBS, ZDIM, HID, ACT = 8, 16, 16, 32, 8
    std_scalar = 0.2

    key = jax.random.PRNGKey(0)
    k_obs, k_z, k_p = jax.random.split(key, 3)
    obs = jax.random.normal(k_obs, (B, OBS), jnp.float32)
    z = jax.random.normal(k_z, (B, ZDIM), jnp.float32)
    params = init_params(k_p, OBS, ZDIM, HID, ACT)

    # single-tile path (grid of 1)
    mu, std = actor_forward(obs, z, std_scalar, params)
    jax.block_until_ready((mu, std))
    mu_r, std_r = actor_forward_ref(obs, z, std_scalar, params)
    assert mu.shape == (B, ACT)
    # bf16 matmul operands (f32 accumulation) -> widened tolerance vs f32 reference
    assert jnp.allclose(mu, mu_r, rtol=2e-2, atol=2e-2), "mu mismatch"
    assert jnp.allclose(std, std_r, rtol=1e-6, atol=1e-6), "std mismatch"

    # multi-tile + ragged-batch path (grid of 2, padded remainder sliced off)
    B2 = 13
    k_o2, k_z2 = jax.random.split(jax.random.PRNGKey(1), 2)
    obs2 = jax.random.normal(k_o2, (B2, OBS), jnp.float32)
    z2 = jax.random.normal(k_z2, (B2, ZDIM), jnp.float32)
    mu2, std2 = actor_forward(obs2, z2, std_scalar, params, tile_b=8)
    jax.block_until_ready((mu2, std2))
    mu2_r, std2_r = actor_forward_ref(obs2, z2, std_scalar, params)
    assert mu2.shape == (B2, ACT)
    assert jnp.allclose(mu2, mu2_r, rtol=2e-2, atol=2e-2), "mu mismatch (tiled)"
    assert jnp.allclose(std2, std2_r, rtol=1e-6, atol=1e-6), "std mismatch (tiled)"

    print("KERNEL_OK")
</pallas_src>

<mosaic_0001>
module attributes {stable_mosaic.version = 11 : i64} {
  func.func @actor_kernel(%arg0: i32, %arg1: memref<8x16xf32, #tpu.memory_space<vmem>>, %arg2: memref<8x16xf32, #tpu.memory_space<vmem>>, %arg3: memref<16x32xbf16, #tpu.memory_space<vmem>>, %arg4: memref<16x32xbf16, #tpu.memory_space<vmem>>, %arg5: memref<1x32xf32, #tpu.memory_space<vmem>>, %arg6: memref<1x32xf32, #tpu.memory_space<vmem>>, %arg7: memref<1x32xf32, #tpu.memory_space<vmem>>, %arg8: memref<32x16xbf16, #tpu.memory_space<vmem>>, %arg9: memref<1x16xf32, #tpu.memory_space<vmem>>, %arg10: memref<16x32xbf16, #tpu.memory_space<vmem>>, %arg11: memref<1x32xf32, #tpu.memory_space<vmem>>, %arg12: memref<1x32xf32, #tpu.memory_space<vmem>>, %arg13: memref<1x32xf32, #tpu.memory_space<vmem>>, %arg14: memref<32x16xbf16, #tpu.memory_space<vmem>>, %arg15: memref<1x16xf32, #tpu.memory_space<vmem>>, %arg16: memref<16x32xbf16, #tpu.memory_space<vmem>>, %arg17: memref<16x32xbf16, #tpu.memory_space<vmem>>, %arg18: memref<1x32xf32, #tpu.memory_space<vmem>>, %arg19: memref<32x128xbf16, #tpu.memory_space<vmem>>, %arg20: memref<1x128xf32, #tpu.memory_space<vmem>>, %arg21: memref<8x128xf32, #tpu.memory_space<vmem>>) attributes {dimension_semantics = [#tpu.dimension_semantics<parallel>], iteration_bounds = array<i64: 1>, scalar_prefetch = 0 : i64, scratch_operands = 0 : i64, tpu.core_type = #tpu.core_type<tc>, window_params = [{transform_indices = @transform_0, window_bounds = array<i64: 8, 16>}, {transform_indices = @transform_1, window_bounds = array<i64: 8, 16>}, {pipeline_mode = #tpu.pipeline_mode<synchronous>, transform_indices = @transform_2, window_bounds = array<i64: 16, 32>}, {pipeline_mode = #tpu.pipeline_mode<synchronous>, transform_indices = @transform_3, window_bounds = array<i64: 16, 32>}, {pipeline_mode = #tpu.pipeline_mode<synchronous>, transform_indices = @transform_4, window_bounds = array<i64: 1, 32>}, {pipeline_mode = #tpu.pipeline_mode<synchronous>, transform_indices = @transform_5, window_bounds = array<i64: 1, 32>}, {pipeline_mode = #tpu.pipeline_mode<synchronous>, transform_indices = @transform_6, window_bounds = array<i64: 1, 32>}, {pipeline_mode = #tpu.pipeline_mode<synchronous>, transform_indices = @transform_7, window_bounds = array<i64: 32, 16>}, {pipeline_mode = #tpu.pipeline_mode<synchronous>, transform_indices = @transform_8, window_bounds = array<i64: 1, 16>}, {pipeline_mode = #tpu.pipeline_mode<synchronous>, transform_indices = @transform_9, window_bounds = array<i64: 16, 32>}, {pipeline_mode = #tpu.pipeline_mode<synchronous>, transform_indices = @transform_10, window_bounds = array<i64: 1, 32>}, {pipeline_mode = #tpu.pipeline_mode<synchronous>, transform_indices = @transform_11, window_bounds = array<i64: 1, 32>}, {pipeline_mode = #tpu.pipeline_mode<synchronous>, transform_indices = @transform_12, window_bounds = array<i64: 1, 32>}, {pipeline_mode = #tpu.pipeline_mode<synchronous>, transform_indices = @transform_13, window_bounds = array<i64: 32, 16>}, {pipeline_mode = #tpu.pipeline_mode<synchronous>, transform_indices = @transform_14, window_bounds = array<i64: 1, 16>}, {pipeline_mode = #tpu.pipeline_mode<synchronous>, transform_indices = @transform_15, window_bounds = array<i64: 16, 32>}, {pipeline_mode = #tpu.pipeline_mode<synchronous>, transform_indices = @transform_16, window_bounds = array<i64: 16, 32>}, {pipeline_mode = #tpu.pipeline_mode<synchronous>, transform_indices = @transform_17, window_bounds = array<i64: 1, 32>}, {pipeline_mode = #tpu.pipeline_mode<synchronous>, transform_indices = @transform_18, window_bounds = array<i64: 32, 128>}, {pipeline_mode = #tpu.pipeline_mode<synchronous>, transform_indices = @transform_19, window_bounds = array<i64: 1, 128>}, {transform_indices = @transform_20, window_bounds = array<i64: 8, 128>}]} {
    %c0 = arith.constant 0 : index
    %c0_0 = arith.constant 0 : index
    %0 = vector.load %arg1[%c0, %c0_0] : memref<8x16xf32, #tpu.memory_space<vmem>>, vector<8x16xf32>
    %1 = arith.truncf %0 : vector<8x16xf32> to vector<8x16xbf16>
    %c0_1 = arith.constant 0 : index
    %c0_2 = arith.constant 0 : index
    %2 = vector.load %arg2[%c0_1, %c0_2] : memref<8x16xf32, #tpu.memory_space<vmem>>, vector<8x16xf32>
    %3 = arith.truncf %2 : vector<8x16xf32> to vector<8x16xbf16>
    %c0_3 = arith.constant 0 : index
    %c0_4 = arith.constant 0 : index
    %4 = vector.load %arg3[%c0_3, %c0_4] : memref<16x32xbf16, #tpu.memory_space<vmem>>, vector<16x32xbf16>
    %cst = arith.constant dense<0.000000e+00> : vector<8x32xf32>
    %5 = tpu.matmul %1, %4, %cst {dimension_numbers = #tpu.dot_dimension_numbers<[1], [0], [0], [1], [0, 0, 1, 1], [], []>} : vector<8x16xbf16>, vector<16x32xbf16>, vector<8x32xf32> -> vector<8x32xf32>
    %c0_5 = arith.constant 0 : index
    %c0_6 = arith.constant 0 : index
    %6 = vector.load %arg4[%c0_5, %c0_6] : memref<16x32xbf16, #tpu.memory_space<vmem>>, vector<16x32xbf16>
    %cst_7 = arith.constant dense<0.000000e+00> : vector<8x32xf32>
    %7 = tpu.matmul %3, %6, %cst_7 {dimension_numbers = #tpu.dot_dimension_numbers<[1], [0], [0], [1], [0, 0, 1, 1], [], []>} : vector<8x16xbf16>, vector<16x32xbf16>, vector<8x32xf32> -> vector<8x32xf32>
    %8 = arith.addf %5, %7 : vector<8x32xf32>
    %c0_8 = arith.constant 0 : index
    %c0_9 = arith.constant 0 : index
    %9 = vector.load %arg5[%c0_8, %c0_9] : memref<1x32xf32, #tpu.memory_space<vmem>>, vector<1x32xf32>
    %10 = vector.broadcast %9 : vector<1x32xf32> to vector<8x32xf32>
    %11 = arith.addf %8, %10 : vector<8x32xf32>
    %c0_10 = arith.constant 0 : index
    %c0_11 = arith.constant 0 : index
    %12 = vector.load %arg6[%c0_10, %c0_11] : memref<1x32xf32, #tpu.memory_space<vmem>>, vector<1x32xf32>
    %c0_12 = arith.constant 0 : index
    %c0_13 = arith.constant 0 : index
    %13 = vector.load %arg7[%c0_12, %c0_13] : memref<1x32xf32, #tpu.memory_space<vmem>>, vector<1x32xf32>
    %cst_14 = arith.constant dense<0.000000e+00> : vector<8xf32>
    %14 = vector.multi_reduction <add>, %11, %cst_14 [1] : vector<8x32xf32> to vector<8xf32>
    %15 = vector.shape_cast %14 : vector<8xf32> to vector<8x1xf32>
    %cst_15 = arith.constant 3.200000e+01 : f32
    %16 = vector.broadcast %cst_15 : f32 to vector<8x1xf32>
    %17 = arith.divf %15, %16 : vector<8x1xf32>
    %18 = vector.broadcast %17 : vector<8x1xf32> to vector<8x32xf32>
    %19 = arith.subf %11, %18 : vector<8x32xf32>
    %20 = arith.mulf %19, %19 : vector<8x32xf32>
    %cst_16 = arith.constant dense<0.000000e+00> : vector<8xf32>
    %21 = vector.multi_reduction <add>, %20, %cst_16 [1] : vector<8x32xf32> to vector<8xf32>
    %22 = vector.shape_cast %21 : vector<8xf32> to vector<8x1xf32>
    %cst_17 = arith.constant 3.200000e+01 : f32
    %23 = vector.broadcast %cst_17 : f32 to vector<8x1xf32>
    %24 = arith.divf %22, %23 : vector<8x1xf32>
    %25 = vector.broadcast %17 : vector<8x1xf32> to vector<8x32xf32>
    %26 = arith.subf %11, %25 : vector<8x32xf32>
    %cst_18 = arith.constant 9.99999974E-6 : f32
    %27 = vector.broadcast %cst_18 : f32 to vector<8x1xf32>
    %28 = arith.addf %24, %27 : vector<8x1xf32>
    %29 = math.rsqrt %28 : vector<8x1xf32>
    %30 = vector.broadcast %29 : vector<8x1xf32> to vector<8x32xf32>
    %31 = arith.mulf %26, %30 : vector<8x32xf32>
    %32 = vector.broadcast %12 : vector<1x32xf32> to vector<8x32xf32>
    %33 = arith.mulf %31, %32 : vector<8x32xf32>
    %34 = vector.broadcast %13 : vector<1x32xf32> to vector<8x32xf32>
    %35 = arith.addf %33, %34 : vector<8x32xf32>
    %36 = math.tanh %35 : vector<8x32xf32>
    %37 = arith.truncf %36 : vector<8x32xf32> to vector<8x32xbf16>
    %c0_19 = arith.constant 0 : index
    %c0_20 = arith.constant 0 : index
    %38 = vector.load %arg8[%c0_19, %c0_20] : memref<32x16xbf16, #tpu.memory_space<vmem>>, vector<32x16xbf16>
    %cst_21 = arith.constant dense<0.000000e+00> : vector<8x16xf32>
    %39 = tpu.matmul %37, %38, %cst_21 {dimension_numbers = #tpu.dot_dimension_numbers<[1], [0], [0], [1], [0, 0, 1, 1], [], []>} : vector<8x32xbf16>, vector<32x16xbf16>, vector<8x16xf32> -> vector<8x16xf32>
    %c0_22 = arith.constant 0 : index
    %c0_23 = arith.constant 0 : index
    %40 = vector.load %arg9[%c0_22, %c0_23] : memref<1x16xf32, #tpu.memory_space<vmem>>, vector<1x16xf32>
    %41 = vector.broadcast %40 : vector<1x16xf32> to vector<8x16xf32>
    %42 = arith.addf %39, %41 : vector<8x16xf32>
    %cst_24 = arith.constant 0.000000e+00 : f32
    %43 = vector.broadcast %cst_24 : f32 to vector<8x16xf32>
    %44 = arith.maximumf %42, %43 : vector<8x16xf32>
    %c0_25 = arith.constant 0 : index
    %c0_26 = arith.constant 0 : index
    %45 = vector.load %arg10[%c0_25, %c0_26] : memref<16x32xbf16, #tpu.memory_space<vmem>>, vector<16x32xbf16>
    %cst_27 = arith.constant dense<0.000000e+00> : vector<8x32xf32>
    %46 = tpu.matmul %1, %45, %cst_27 {dimension_numbers = #tpu.dot_dimension_numbers<[1], [0], [0], [1], [0, 0, 1, 1], [], []>} : vector<8x16xbf16>, vector<16x32xbf16>, vector<8x32xf32> -> vector<8x32xf32>
    %c0_28 = arith.constant 0 : index
    %c0_29 = arith.constant 0 : index
    %47 = vector.load %arg11[%c0_28, %c0_29] : memref<1x32xf32, #tpu.memory_space<vmem>>, vector<1x32xf32>
    %48 = vector.broadcast %47 : vector<1x32xf32> to vector<8x32xf32>
    %49 = arith.addf %46, %48 : vector<8x32xf32>
    %c0_30 = arith.constant 0 : index
    %c0_31 = arith.constant 0 : index
    %50 = vector.load %arg12[%c0_30, %c0_31] : memref<1x32xf32, #tpu.memory_space<vmem>>, vector<1x32xf32>
    %c0_32 = arith.constant 0 : index
    %c0_33 = arith.constant 0 : index
    %51 = vector.load %arg13[%c0_32, %c0_33] : memref<1x32xf32, #tpu.memory_space<vmem>>, vector<1x32xf32>
    %cst_34 = arith.constant dense<0.000000e+00> : vector<8xf32>
    %52 = vector.multi_reduction <add>, %49, %cst_34 [1] : vector<8x32xf32> to vector<8xf32>
    %53 = vector.shape_cast %52 : vector<8xf32> to vector<8x1xf32>
    %cst_35 = arith.constant 3.200000e+01 : f32
    %54 = vector.broadcast %cst_35 : f32 to vector<8x1xf32>
    %55 = arith.divf %53, %54 : vector<8x1xf32>
    %56 = vector.broadcast %55 : vector<8x1xf32> to vector<8x32xf32>
    %57 = arith.subf %49, %56 : vector<8x32xf32>
    %58 = arith.mulf %57, %57 : vector<8x32xf32>
    %cst_36 = arith.constant dense<0.000000e+00> : vector<8xf32>
    %59 = vector.multi_reduction <add>, %58, %cst_36 [1] : vector<8x32xf32> to vector<8xf32>
    %60 = vector.shape_cast %59 : vector<8xf32> to vector<8x1xf32>
    %cst_37 = arith.constant 3.200000e+01 : f32
    %61 = vector.broadcast %cst_37 : f32 to vector<8x1xf32>
    %62 = arith.divf %60, %61 : vector<8x1xf32>
    %63 = vector.broadcast %55 : vector<8x1xf32> to vector<8x32xf32>
    %64 = arith.subf %49, %63 : vector<8x32xf32>
    %cst_38 = arith.constant 9.99999974E-6 : f32
    %65 = vector.broadcast %cst_38 : f32 to vector<8x1xf32>
    %66 = arith.addf %62, %65 : vector<8x1xf32>
    %67 = math.rsqrt %66 : vector<8x1xf32>
    %68 = vector.broadcast %67 : vector<8x1xf32> to vector<8x32xf32>
    %69 = arith.mulf %64, %68 : vector<8x32xf32>
    %70 = vector.broadcast %50 : vector<1x32xf32> to vector<8x32xf32>
    %71 = arith.mulf %69, %70 : vector<8x32xf32>
    %72 = vector.broadcast %51 : vector<1x32xf32> to vector<8x32xf32>
    %73 = arith.addf %71, %72 : vector<8x32xf32>
    %74 = math.tanh %73 : vector<8x32xf32>
    %75 = arith.truncf %74 : vector<8x32xf32> to vector<8x32xbf16>
    %c0_39 = arith.constant 0 : index
    %c0_40 = arith.constant 0 : index
    %76 = vector.load %arg14[%c0_39, %c0_40] : memref<32x16xbf16, #tpu.memory_space<vmem>>, vector<32x16xbf16>
    %cst_41 = arith.constant dense<0.000000e+00> : vector<8x16xf32>
    %77 = tpu.matmul %75, %76, %cst_41 {dimension_numbers = #tpu.dot_dimension_numbers<[1], [0], [0], [1], [0, 0, 1, 1], [], []>} : vector<8x32xbf16>, vector<32x16xbf16>, vector<8x16xf32> -> vector<8x16xf32>
    %c0_42 = arith.constant 0 : index
    %c0_43 = arith.constant 0 : index
    %78 = vector.load %arg15[%c0_42, %c0_43] : memref<1x16xf32, #tpu.memory_space<vmem>>, vector<1x16xf32>
    %79 = vector.broadcast %78 : vector<1x16xf32> to vector<8x16xf32>
    %80 = arith.addf %77, %79 : vector<8x16xf32>
    %cst_44 = arith.constant 0.000000e+00 : f32
    %81 = vector.broadcast %cst_44 : f32 to vector<8x16xf32>
    %82 = arith.maximumf %80, %81 : vector<8x16xf32>
    %83 = arith.truncf %82 : vector<8x16xf32> to vector<8x16xbf16>
    %c0_45 = arith.constant 0 : index
    %c0_46 = arith.constant 0 : index
    %84 = vector.load %arg16[%c0_45, %c0_46] : memref<16x32xbf16, #tpu.memory_space<vmem>>, vector<16x32xbf16>
    %cst_47 = arith.constant dense<0.000000e+00> : vector<8x32xf32>
    %85 = tpu.matmul %83, %84, %cst_47 {dimension_numbers = #tpu.dot_dimension_numbers<[1], [0], [0], [1], [0, 0, 1, 1], [], []>} : vector<8x16xbf16>, vector<16x32xbf16>, vector<8x32xf32> -> vector<8x32xf32>
    %86 = arith.truncf %44 : vector<8x16xf32> to vector<8x16xbf16>
    %c0_48 = arith.constant 0 : index
    %c0_49 = arith.constant 0 : index
    %87 = vector.load %arg17[%c0_48, %c0_49] : memref<16x32xbf16, #tpu.memory_space<vmem>>, vector<16x32xbf16>
    %cst_50 = arith.constant dense<0.000000e+00> : vector<8x32xf32>
    %88 = tpu.matmul %86, %87, %cst_50 {dimension_numbers = #tpu.dot_dimension_numbers<[1], [0], [0], [1], [0, 0, 1, 1], [], []>} : vector<8x16xbf16>, vector<16x32xbf16>, vector<8x32xf32> -> vector<8x32xf32>
    %89 = arith.addf %85, %88 : vector<8x32xf32>
    %c0_51 = arith.constant 0 : index
    %c0_52 = arith.constant 0 : index
    %90 = vector.load %arg18[%c0_51, %c0_52] : memref<1x32xf32, #tpu.memory_space<vmem>>, vector<1x32xf32>
    %91 = vector.broadcast %90 : vector<1x32xf32> to vector<8x32xf32>
    %92 = arith.addf %89, %91 : vector<8x32xf32>
    %cst_53 = arith.constant 0.000000e+00 : f32
    %93 = vector.broadcast %cst_53 : f32 to vector<8x32xf32>
    %94 = arith.maximumf %92, %93 : vector<8x32xf32>
    %95 = arith.truncf %94 : vector<8x32xf32> to vector<8x32xbf16>
    %c0_54 = arith.constant 0 : index
    %c0_55 = arith.constant 0 : index
    %96 = vector.load %arg19[%c0_54, %c0_55] : memref<32x128xbf16, #tpu.memory_space<vmem>>, vector<32x128xbf16>
    %cst_56 = arith.constant dense<0.000000e+00> : vector<8x128xf32>
    %97 = tpu.matmul %95, %96, %cst_56 {dimension_numbers = #tpu.dot_dimension_numbers<[1], [0], [0], [1], [0, 0, 1, 1], [], []>} : vector<8x32xbf16>, vector<32x128xbf16>, vector<8x128xf32> -> vector<8x128xf32>
    %c0_57 = arith.constant 0 : index
    %c0_58 = arith.constant 0 : index
    %98 = vector.load %arg20[%c0_57, %c0_58] : memref<1x128xf32, #tpu.memory_space<vmem>>, vector<1x128xf32>
    %99 = vector.broadcast %98 : vector<1x128xf32> to vector<8x128xf32>
    %100 = arith.addf %97, %99 : vector<8x128xf32>
    %101 = math.tanh %100 : vector<8x128xf32>
    %c0_59 = arith.constant 0 : index
    %c0_60 = arith.constant 0 : index
    %102 = vector.load %arg21[%c0_59, %c0_60] : memref<8x128xf32, #tpu.memory_space<vmem>>, vector<8x128xf32>
    tpu.vector_store %arg21[%c0_59, %c0_60], %101 {strides = array<i32>} : memref<8x128xf32, #tpu.memory_space<vmem>>, vector<8x128xf32>,
    return
  }
  func.func @transform_0(%arg0: i32) -> (i32, i32) {
    %c0_i32 = arith.constant 0 : i32
    %c0_i32_0 = arith.constant 0 : i32
    return %arg0, %c0_i32 : i32, i32
  }
  func.func @transform_1(%arg0: i32) -> (i32, i32) {
    %c0_i32 = arith.constant 0 : i32
    %c0_i32_0 = arith.constant 0 : i32
    return %arg0, %c0_i32 : i32, i32
  }
  func.func @transform_2(%arg0: i32) -> (i32, i32) {
    %c0_i32 = arith.constant 0 : i32
    %c0_i32_0 = arith.constant 0 : i32
    %c0_i32_1 = arith.constant 0 : i32
    return %c0_i32, %c0_i32_0 : i32, i32
  }
  func.func @transform_3(%arg0: i32) -> (i32, i32) {
    %c0_i32 = arith.constant 0 : i32
    %c0_i32_0 = arith.constant 0 : i32
    %c0_i32_1 = arith.constant 0 : i32
    return %c0_i32, %c0_i32_0 : i32, i32
  }
  func.func @transform_4(%arg0: i32) -> (i32, i32) {
    %c0_i32 = arith.constant 0 : i32
    %c0_i32_0 = arith.constant 0 : i32
    %c0_i32_1 = arith.constant 0 : i32
    return %c0_i32, %c0_i32_0 : i32, i32
  }
  func.func @transform_5(%arg0: i32) -> (i32, i32) {
    %c0_i32 = arith.constant 0 : i32
    %c0_i32_0 = arith.constant 0 : i32
    %c0_i32_1 = arith.constant 0 : i32
    return %c0_i32, %c0_i32_0 : i32, i32
  }
  func.func @transform_6(%arg0: i32) -> (i32, i32) {
    %c0_i32 = arith.constant 0 : i32
    %c0_i32_0 = arith.constant 0 : i32
    %c0_i32_1 = arith.constant 0 : i32
    return %c0_i32, %c0_i32_0 : i32, i32
  }
  func.func @transform_7(%arg0: i32) -> (i32, i32) {
    %c0_i32 = arith.constant 0 : i32
    %c0_i32_0 = arith.constant 0 : i32
    %c0_i32_1 = arith.constant 0 : i32
    return %c0_i32, %c0_i32_0 : i32, i32
  }
  func.func @transform_8(%arg0: i32) -> (i32, i32) {
    %c0_i32 = arith.constant 0 : i32
    %c0_i32_0 = arith.constant 0 : i32
    %c0_i32_1 = arith.constant 0 : i32
    return %c0_i32, %c0_i32_0 : i32, i32
  }
  func.func @transform_9(%arg0: i32) -> (i32, i32) {
    %c0_i32 = arith.constant 0 : i32
    %c0_i32_0 = arith.constant 0 : i32
    %c0_i32_1 = arith.constant 0 : i32
    return %c0_i32, %c0_i32_0 : i32, i32
  }
  func.func @transform_10(%arg0: i32) -> (i32, i32) {
    %c0_i32 = arith.constant 0 : i32
    %c0_i32_0 = arith.constant 0 : i32
    %c0_i32_1 = arith.constant 0 : i32
    return %c0_i32, %c0_i32_0 : i32, i32
  }
  func.func @transform_11(%arg0: i32) -> (i32, i32) {
    %c0_i32 = arith.constant 0 : i32
    %c0_i32_0 = arith.constant 0 : i32
    %c0_i32_1 = arith.constant 0 : i32
    return %c0_i32, %c0_i32_0 : i32, i32
  }
  func.func @transform_12(%arg0: i32) -> (i32, i32) {
    %c0_i32 = arith.constant 0 : i32
    %c0_i32_0 = arith.constant 0 : i32
    %c0_i32_1 = arith.constant 0 : i32
    return %c0_i32, %c0_i32_0 : i32, i32
  }
  func.func @transform_13(%arg0: i32) -> (i32, i32) {
    %c0_i32 = arith.constant 0 : i32
    %c0_i32_0 = arith.constant 0 : i32
    %c0_i32_1 = arith.constant 0 : i32
    return %c0_i32, %c0_i32_0 : i32, i32
  }
  func.func @transform_14(%arg0: i32) -> (i32, i32) {
    %c0_i32 = arith.constant 0 : i32
    %c0_i32_0 = arith.constant 0 : i32
    %c0_i32_1 = arith.constant 0 : i32
    return %c0_i32, %c0_i32_0 : i32, i32
  }
  func.func @transform_15(%arg0: i32) -> (i32, i32) {
    %c0_i32 = arith.constant 0 : i32
    %c0_i32_0 = arith.constant 0 : i32
    %c0_i32_1 = arith.constant 0 : i32
    return %c0_i32, %c0_i32_0 : i32, i32
  }
  func.func @transform_16(%arg0: i32) -> (i32, i32) {
    %c0_i32 = arith.constant 0 : i32
    %c0_i32_0 = arith.constant 0 : i32
    %c0_i32_1 = arith.constant 0 : i32
    return %c0_i32, %c0_i32_0 : i32, i32
  }
  func.func @transform_17(%arg0: i32) -> (i32, i32) {
    %c0_i32 = arith.constant 0 : i32
    %c0_i32_0 = arith.constant 0 : i32
    %c0_i32_1 = arith.constant 0 : i32
    return %c0_i32, %c0_i32_0 : i32, i32
  }
  func.func @transform_18(%arg0: i32) -> (i32, i32) {
    %c0_i32 = arith.constant 0 : i32
    %c0_i32_0 = arith.constant 0 : i32
    %c0_i32_1 = arith.constant 0 : i32
    return %c0_i32, %c0_i32_0 : i32, i32
  }
  func.func @transform_19(%arg0: i32) -> (i32, i32) {
    %c0_i32 = arith.constant 0 : i32
    %c0_i32_0 = arith.constant 0 : i32
    %c0_i32_1 = arith.constant 0 : i32
    return %c0_i32, %c0_i32_0 : i32, i32
  }
  func.func @transform_20(%arg0: i32) -> (i32, i32) {
    %c0_i32 = arith.constant 0 : i32
    %c0_i32_0 = arith.constant 0 : i32
    return %arg0, %c0_i32 : i32, i32
  }
}

</mosaic_0001>

<llo_original>
// kernel: tpu_custom_call.1
$region0: #{tpu_custom_call.1}
  #allocation0 [shape = 'u32[]', space=smem, size = 0x4, offset = 0x4, fixed_abs, tag = 'smem constant byte address 0x4 - core index']
  #allocation1 [shape = 'u32[72,128]{1,0:T(1,128)}', space=vmem, size = 0x9000, scoped, tag = 'internal scratch']
  %s0 = inlined_call_operand.vmem [shape: f32[8,16], index: 0, kind: input, shape index: {}]
  %s1 = inlined_call_operand.vmem [shape: f32[8,16], index: 1, kind: input, shape index: {}]
  %s2 = inlined_call_operand.vmem [shape: bf16[16,32], index: 2, kind: input, shape index: {}]
  %s3 = inlined_call_operand.hbm [shape: bf16[16,32], index: 3, kind: input, shape index: {}]
  %s4 = inlined_call_operand.hbm [shape: f32[1,32], index: 4, kind: input, shape index: {}]
  %s5 = inlined_call_operand.hbm [shape: f32[1,32], index: 5, kind: input, shape index: {}]
  %s6 = inlined_call_operand.hbm [shape: f32[1,32], index: 6, kind: input, shape index: {}]
  %s7 = inlined_call_operand.vmem [shape: bf16[32,16], index: 7, kind: input, shape index: {}]
  %s8 = inlined_call_operand.hbm [shape: f32[1,16], index: 8, kind: input, shape index: {}]
  %s9 = inlined_call_operand.vmem [shape: bf16[16,32], index: 9, kind: input, shape index: {}]
  %s10 = inlined_call_operand.vmem [shape: f32[1,32], index: 10, kind: input, shape index: {}]
  %s11 = inlined_call_operand.vmem [shape: f32[1,32], index: 11, kind: input, shape index: {}]
  %s12 = inlined_call_operand.vmem [shape: f32[1,32], index: 12, kind: input, shape index: {}]
  %s13 = inlined_call_operand.vmem [shape: bf16[32,16], index: 13, kind: input, shape index: {}]
  %s14 = inlined_call_operand.vmem [shape: f32[1,16], index: 14, kind: input, shape index: {}]
  %s15 = inlined_call_operand.hbm [shape: bf16[16,32], index: 15, kind: input, shape index: {}]
  %s16 = inlined_call_operand.hbm [shape: bf16[16,32], index: 16, kind: input, shape index: {}]
  %s17 = inlined_call_operand.vmem [shape: f32[1,32], index: 17, kind: input, shape index: {}]
  %s18 = inlined_call_operand.vmem [shape: bf16[32,128], index: 18, kind: input, shape index: {}]
  %s19 = inlined_call_operand.vmem [shape: f32[1,128], index: 19, kind: input, shape index: {}]
  %s20 = inlined_call_operand.hbm [shape: f32[8,128], index: 20, kind: output, shape index: {}]
  %s21 = sld [smem:[#allocation0]]
  $region118: #{tpu_custom_call.1} parent=0
    _
  %s23 = ssub.s32 1, %s21
  %s24 = scalar_select 0, %s23, %s21
  $region1: #{tpu_custom_call.1} parent=0
    #allocation2 [shape = 'u8[4096]{0}', space=vmem, size = 0x1000, scoped, tag = 'input window, operand 3, single buffered']
    #allocation3 [shape = 's32[1]{0}', space=sflag, size = 0x4, scoped, tag = 'scoped memory for tpu_custom_call.1']
    #allocation4 [shape = 's32[1]{0}', space=sflag, size = 0x4, scoped, tag = 'scoped memory for tpu_custom_call.1']
    #allocation5 [shape = 'u8[512]{0}', space=vmem, size = 0x400, scoped, tag = 'input window, operand 4, single buffered']
    #allocation6 [shape = 's32[1]{0}', space=sflag, size = 0x4, scoped, tag = 'scoped memory for tpu_custom_call.1']
    #allocation7 [shape = 'u8[512]{0}', space=vmem, size = 0x400, scoped, tag = 'input window, operand 5, single buffered']
    #allocation8 [shape = 'u8[512]{0}', space=vmem, size = 0x400, scoped, tag = 'input window, operand 6, single buffered']
    #allocation9 [shape = 's32[1]{0}', space=sflag, size = 0x4, scoped, tag = 'scoped memory for tpu_custom_call.1']
    #allocation10 [shape = 'u8[512]{0}', space=vmem, size = 0x400, scoped, tag = 'input window, operand 8, single buffered']
    #allocation11 [shape = 'u8[4096]{0}', space=vmem, size = 0x1000, scoped, tag = 'input window, operand 15, single buffered']
    #allocation12 [shape = 's32[1]{0}', space=sflag, size = 0x4, scoped, tag = 'scoped memory for tpu_custom_call.1']
    #allocation13 [shape = 'u8[4096]{0}', space=vmem, size = 0x1000, scoped, tag = 'input window, operand 16, single buffered']
    #allocation14 [shape = 'u8[4096]{0}', space=vmem, size = 0x1000, scoped, tag = 'output window, operand 0, single buffered']
    %25 = vsyncpa [#allocation3], 0
    %26 = vsyncpa [#allocation6], 0
    %27 = vsyncpa [#allocation9], 0
    %28 = vsyncpa [#allocation12], 0
    %29 = vsyncpa [#allocation4], 0
    // Predicated region
    $region2: #{tpu_custom_call.1} parent=1 // pred_check
      _
    $region3: #{tpu_custom_call.1} parent=1 // pred_check_branch
      %31 = sbr.rel (0) target = $region5
    $region4: #{tpu_custom_call.1} parent=1 // pred_region
      _
    $region5: #{tpu_custom_call.1} parent=1 // pred_fallthru
      _
    // Predicated region
    $region6: #{tpu_custom_call.1} parent=1 // pred_check
      _
    $region7: #{tpu_custom_call.1} parent=1 // pred_check_branch
      %33 = sbr.rel (0) target = $region9
    $region8: #{tpu_custom_call.1} parent=1 // pred_region
      _
    $region9: #{tpu_custom_call.1} parent=1 // pred_fallthru
      _
    // Predicated region
    $region10: #{tpu_custom_call.1} parent=1 // pred_check
      _
    $region11: #{tpu_custom_call.1} parent=1 // pred_check_branch
      %35 = sbr.rel (0) target = $region13
    $region12: #{tpu_custom_call.1} parent=1 // pred_region
      _
    $region13: #{tpu_custom_call.1} parent=1 // pred_fallthru
      _
    // Predicated region
    $region14: #{tpu_custom_call.1} parent=1 // pred_check
      _
    $region15: #{tpu_custom_call.1} parent=1 // pred_check_branch
      %37 = sbr.rel (0) target = $region17
    $region16: #{tpu_custom_call.1} parent=1 // pred_region
      %39 = vsyncadd [#allocation3], 0
      %s40 = sshll.u32 %s3, 4
      %s41 = int_to_ptr.hbm [resolvable:$true] %s40
      %s42 = sshll.u32 [#allocation2], 4
      %s43 = int_to_ptr.vmem [resolvable:$true] %s42
      %48 = dma.hbm_to_vmem [thread:$0]  %s41, 128, %s43, [#allocation3], 64, 64, 4
    $region17: #{tpu_custom_call.1} parent=1 // pred_fallthru
      _
    // Predicated region
    $region18: #{tpu_custom_call.1} parent=1 // pred_check
      _
    $region19: #{tpu_custom_call.1} parent=1 // pred_check_branch
      %50 = sbr.rel (0) target = $region21
    $region20: #{tpu_custom_call.1} parent=1 // pred_region
      %52 = vsyncadd [#allocation6], 0
      %s54 = sshll.u32 %s4, 4
      %s55 = int_to_ptr.hbm [resolvable:$true] %s54
      %s56 = sshll.u32 [#allocation5], 4
      %s57 = int_to_ptr.vmem [resolvable:$true] %s56
      %59 = dma.hbm_to_vmem [thread:$0]  %s55, 16, %s57, [#allocation6]
    $region21: #{tpu_custom_call.1} parent=1 // pred_fallthru
      _
    // Predicated region
    $region22: #{tpu_custom_call.1} parent=1 // pred_check
      _
    $region23: #{tpu_custom_call.1} parent=1 // pred_check_branch
      %61 = sbr.rel (0) target = $region25
    $region24: #{tpu_custom_call.1} parent=1 // pred_region
      %63 = vsyncadd [#allocation6], 0
      %s65 = sshll.u32 %s5, 4
      %s66 = int_to_ptr.hbm [resolvable:$true] %s65
      %s67 = sshll.u32 [#allocation7], 4
      %s68 = int_to_ptr.vmem [resolvable:$true] %s67
      %70 = dma.hbm_to_vmem [thread:$0]  %s66, 16, %s68, [#allocation6]
    $region25: #{tpu_custom_call.1} parent=1 // pred_fallthru
      _
    // Predicated region
    $region26: #{tpu_custom_call.1} parent=1 // pred_check
      _
    $region27: #{tpu_custom_call.1} parent=1 // pred_check_branch
      %72 = sbr.rel (0) target = $region29
    $region28: #{tpu_custom_call.1} parent=1 // pred_region
      %74 = vsyncadd [#allocation9], 0
      %s76 = sshll.u32 %s6, 4
      %s77 = int_to_ptr.hbm [resolvable:$true] %s76
      %s78 = sshll.u32 [#allocation8], 4
      %s79 = int_to_ptr.vmem [resolvable:$true] %s78
      %81 = dma.hbm_to_vmem [thread:$0]  %s77, 16, %s79, [#allocation9]
    $region29: #{tpu_custom_call.1} parent=1 // pred_fallthru
      _
    // Predicated region
    $region30: #{tpu_custom_call.1} parent=1 // pred_check
      _
    $region31: #{tpu_custom_call.1} parent=1 // pred_check_branch
      %83 = sbr.rel (0) target = $region33
    $region32: #{tpu_custom_call.1} parent=1 // pred_region
      _
    $region33: #{tpu_custom_call.1} parent=1 // pred_fallthru
      _
    // Predicated region
    $region34: #{tpu_custom_call.1} parent=1 // pred_check
      _
    $region35: #{tpu_custom_call.1} parent=1 // pred_check_branch
      %85 = sbr.rel (0) target = $region37
    $region36: #{tpu_custom_call.1} parent=1 // pred_region
      %87 = vsyncadd [#allocation9], 0
      %s89 = sshll.u32 %s8, 4
      %s90 = int_to_ptr.hbm [resolvable:$true] %s89
      %s91 = sshll.u32 [#allocation10], 4
      %s92 = int_to_ptr.vmem [resolvable:$true] %s91
      %94 = dma.hbm_to_vmem [thread:$0]  %s90, 16, %s92, [#allocation9]
    $region37: #{tpu_custom_call.1} parent=1 // pred_fallthru
      _
    // Predicated region
    $region38: #{tpu_custom_call.1} parent=1 // pred_check
      _
    $region39: #{tpu_custom_call.1} parent=1 // pred_check_branch
      %96 = sbr.rel (0) target = $region41
    $region40: #{tpu_custom_call.1} parent=1 // pred_region
      _
    $region41: #{tpu_custom_call.1} parent=1 // pred_fallthru
      _
    // Predicated region
    $region42: #{tpu_custom_call.1} parent=1 // pred_check
      _
    $region43: #{tpu_custom_call.1} parent=1 // pred_check_branch
      %98 = sbr.rel (0) target = $region45
    $region44: #{tpu_custom_call.1} parent=1 // pred_region
      _
    $region45: #{tpu_custom_call.1} parent=1 // pred_fallthru
      _
    // Predicated region
    $region46: #{tpu_custom_call.1} parent=1 // pred_check
      _
    $region47: #{tpu_custom_call.1} parent=1 // pred_check_branch
      %100 = sbr.rel (0) target = $region49
    $region48: #{tpu_custom_call.1} parent=1 // pred_region
      _
    $region49: #{tpu_custom_call.1} parent=1 // pred_fallthru
      _
    // Predicated region
    $region50: #{tpu_custom_call.1} parent=1 // pred_check
      _
    $region51: #{tpu_custom_call.1} parent=1 // pred_check_branch
      %102 = sbr.rel (0) target = $region53
    $region52: #{tpu_custom_call.1} parent=1 // pred_region
      _
    $region53: #{tpu_custom_call.1} parent=1 // pred_fallthru
      _
    // Predicated region
    $region54: #{tpu_custom_call.1} parent=1 // pred_check
      _
    $region55: #{tpu_custom_call.1} parent=1 // pred_check_branch
      %104 = sbr.rel (0) target = $region57
    $region56: #{tpu_custom_call.1} parent=1 // pred_region
      _
    $region57: #{tpu_custom_call.1} parent=1 // pred_fallthru
      _
    // Predicated region
    $region58: #{tpu_custom_call.1} parent=1 // pred_check
      _
    $region59: #{tpu_custom_call.1} parent=1 // pred_check_branch
      %106 = sbr.rel (0) target = $region61
    $region60: #{tpu_custom_call.1} parent=1 // pred_region
      _
    $region61: #{tpu_custom_call.1} parent=1 // pred_fallthru
      _
    // Predicated region
    $region62: #{tpu_custom_call.1} parent=1 // pred_check
      _
    $region63: #{tpu_custom_call.1} parent=1 // pred_check_branch
      %108 = sbr.rel (0) target = $region65
    $region64: #{tpu_custom_call.1} parent=1 // pred_region
      %110 = vsyncadd [#allocation12], 0
      %s111 = sshll.u32 %s15, 4
      %s112 = int_to_ptr.hbm [resolvable:$true] %s111
      %s113 = sshll.u32 [#allocation11], 4
      %s114 = int_to_ptr.vmem [resolvable:$true] %s113
      %119 = dma.hbm_to_vmem [thread:$0]  %s112, 128, %s114, [#allocation12], 64, 64, 4
    $region65: #{tpu_custom_call.1} parent=1 // pred_fallthru
      _
    // Predicated region
    $region66: #{tpu_custom_call.1} parent=1 // pred_check
      _
    $region67: #{tpu_custom_call.1} parent=1 // pred_check_branch
      %121 = sbr.rel (0) target = $region69
    $region68: #{tpu_custom_call.1} parent=1 // pred_region
      %123 = vsyncadd [#allocation12], 0
      %s124 = sshll.u32 %s16, 4
      %s125 = int_to_ptr.hbm [resolvable:$true] %s124
      %s126 = sshll.u32 [#allocation13], 4
      %s127 = int_to_ptr.vmem [resolvable:$true] %s126
      %132 = dma.hbm_to_vmem [thread:$0]  %s125, 128, %s127, [#allocation12], 64, 64, 4
    $region69: #{tpu_custom_call.1} parent=1 // pred_fallthru
      _
    // Predicated region
    $region70: #{tpu_custom_call.1} parent=1 // pred_check
      _
    $region71: #{tpu_custom_call.1} parent=1 // pred_check_branch
      %134 = sbr.rel (0) target = $region73
    $region72: #{tpu_custom_call.1} parent=1 // pred_region
      _
    $region73: #{tpu_custom_call.1} parent=1 // pred_fallthru
      _
    // Predicated region
    $region74: #{tpu_custom_call.1} parent=1 // pred_check
      _
    $region75: #{tpu_custom_call.1} parent=1 // pred_check_branch
      %136 = sbr.rel (0) target = $region77
    $region76: #{tpu_custom_call.1} parent=1 // pred_region
      _
    $region77: #{tpu_custom_call.1} parent=1 // pred_fallthru
      _
    // Predicated region
    $region78: #{tpu_custom_call.1} parent=1 // pred_check
      _
    $region79: #{tpu_custom_call.1} parent=1 // pred_check_branch
      %138 = sbr.rel (0) target = $region81
    $region80: #{tpu_custom_call.1} parent=1 // pred_region
      _
    $region81: #{tpu_custom_call.1} parent=1 // pred_fallthru
      _
    // Predicated region
    $region82: #{tpu_custom_call.1} parent=1 // pred_check
      _
    $region83: #{tpu_custom_call.1} parent=1 // pred_check_branch
      %140 = sbr.rel (0) target = $region85
    $region84: #{tpu_custom_call.1} parent=1 // pred_region
      %142 = dma.done [#allocation3], 128
    $region85: #{tpu_custom_call.1} parent=1 // pred_fallthru
      _
    // Predicated region
    $region86: #{tpu_custom_call.1} parent=1 // pred_check
      _
    $region87: #{tpu_custom_call.1} parent=1 // pred_check_branch
      %144 = sbr.rel (0) target = $region89
    $region88: #{tpu_custom_call.1} parent=1 // pred_region
      %146 = dma.done [#allocation6], 16
    $region89: #{tpu_custom_call.1} parent=1 // pred_fallthru
      _
    // Predicated region
    $region90: #{tpu_custom_call.1} parent=1 // pred_check
      _
    $region91: #{tpu_custom_call.1} parent=1 // pred_check_branch
      %148 = sbr.rel (0) target = $region93
    $region92: #{tpu_custom_call.1} parent=1 // pred_region
      %150 = dma.done [#allocation6], 16
    $region93: #{tpu_custom_call.1} parent=1 // pred_fallthru
      _
    // Predicated region
    $region94: #{tpu_custom_call.1} parent=1 // pred_check
      _
    $region95: #{tpu_custom_call.1} parent=1 // pred_check_branch
      %152 = sbr.rel (0) target = $region97
    $region96: #{tpu_custom_call.1} parent=1 // pred_region
      %154 = dma.done [#allocation9], 16
    $region97: #{tpu_custom_call.1} parent=1 // pred_fallthru
      _
    // Predicated region
    $region98: #{tpu_custom_call.1} parent=1 // pred_check
      _
    $region99: #{tpu_custom_call.1} parent=1 // pred_check_branch
      %156 = sbr.rel (0) target = $region101
    $region100: #{tpu_custom_call.1} parent=1 // pred_region
      %158 = dma.done [#allocation9], 16
    $region101: #{tpu_custom_call.1} parent=1 // pred_fallthru
      _
    // Predicated region
    $region102: #{tpu_custom_call.1} parent=1 // pred_check
      _
    $region103: #{tpu_custom_call.1} parent=1 // pred_check_branch
      %160 = sbr.rel (0) target = $region105
    $region104: #{tpu_custom_call.1} parent=1 // pred_region
      %162 = dma.done [#allocation12], 128
    $region105: #{tpu_custom_call.1} parent=1 // pred_fallthru
      _
    // Predicated region
    $region106: #{tpu_custom_call.1} parent=1 // pred_check
      _
    $region107: #{tpu_custom_call.1} parent=1 // pred_check_branch
      %164 = sbr.rel (0) target = $region109
    $region108: #{tpu_custom_call.1} parent=1 // pred_region
      %166 = dma.done [#allocation12], 128
    $region109: #{tpu_custom_call.1} parent=1 // pred_fallthru
      _
    %v168 = vld [vmem:[%s0] sm:$0xff]
    %v169 = vpack.c.bf16 %v168, %v168
    %v170 = vld [vmem:[%s1] sm:$0xff]
    %v171 = vpack.c.bf16 %v170, %v170
    %v172 = vld [vmem:[%s2] sm:$0xf]
    %v173 = vld [vmem:[%s2 + $0x4] sm:$0xf]
    %v174 = vld [vmem:[#allocation2] sm:$0xf]
    %v175 = vld [vmem:[#allocation2 + $0x4] sm:$0xf]
    %v178 = vunpack.c.l.b16 %v174
    %v179 = vunpack.c.l.b16 %v175
    %v180 = vpack.c.b16 %v179, %v178
    %vm182 = vcmask 130048
    %v184 = vsel %vm182, %v171, 0
    %186 = vmatpush.bf16.msra.mxu0 0
    %187 = vmatpush.bf16.msra.mxu0 0
    %188 = vmatpush.bf16.msra.mxu0 0
    %189 = vmatpush.bf16.msra.mxu0 0
    %190 = vmatpush.bf16.msra.mxu0 0
    %191 = vmatpush.bf16.msra.mxu0 0
    %192 = vmatpush.bf16.msra.mxu0 0
    %193 = vmatpush.bf16.msra.mxu0 %v180
    %194 = vmatmul.bf16.gmra.mxu0 %v184
    %v195 = vpop.f32.mrf.mxu0
    %v196 = vadd.f32 0.0, %v195
    %v197 = vpop.f32.mrf.mxu0
    %198 = vdwg.mxu0
    %v201 = vunpack.c.l.b16 %v172
    %v202 = vunpack.c.l.b16 %v173
    %v203 = vpack.c.b16 %v202, %v201
    %v206 = vsel %vm182, %v169, 0
    %208 = vmatpush.bf16.msra.mxu0 0
    %209 = vmatpush.bf16.msra.mxu0 0
    %210 = vmatpush.bf16.msra.mxu0 0
    %211 = vmatpush.bf16.msra.mxu0 0
    %212 = vmatpush.bf16.msra.mxu0 0
    %213 = vmatpush.bf16.msra.mxu0 0
    %214 = vmatpush.bf16.msra.mxu0 0
    %215 = vmatpush.bf16.msra.mxu0 %v203
    %216 = vmatmul.bf16.gmra.mxu0 %v206
    %v217 = vpop.f32.mrf.mxu0
    %v218 = vadd.f32 %v196, %v217
    %v219 = vpop.f32.mrf.mxu0
    %220 = vdwg.mxu0
    %v221 = vld [vmem:[#allocation5] sm:$0x1]
    %v223 = vperm.slane %v221, 0
    %v225 = vadd.f32 %v218, %v223
    %v226 = vld [vmem:[#allocation7] sm:$0x1]
    %v227 = vld [vmem:[#allocation8] sm:$0x1]
    %vm228 = vcmask 261120
    %v229 = vsel %vm228, %v225, 0.0
    %230 = vadd.xlane.f32.xlu0 %v229
    %v231 = vpop.xlane.xlu0 %230
    %v232 = vrcp.pop 32.0
    %v233 = vmul.f32 32.0, %v232
    %v234 = vsub.f32 1.0, %v233
    %v235 = vmul.f32 %v232, %v234
    %v236 = vadd.f32 %v232, %v235
    %vm237 = vweird.f32 %v232
    %v238 = vsel %vm237, %v232, %v236
    %v239 = vmul.f32 %v231, %v238
    %v240 = vsub.f32 %v225, %v239
    %v241 = vmul.f32 %v240, %v240
    %v242 = vsel %vm228, %v241, 0.0
    %243 = vadd.xlane.f32.xlu0 %v242
    %v244 = vpop.xlane.xlu0 %243
    %v245 = vmul.f32 %v244, %v238
    %v246 = vadd.f32 %v245, 1e-05
    %v247 = vrsqrt.pop %v246
    %v248 = vmul.f32 %v247, %v246
    %v249 = vmul.f32 %v248, %v247
    %v250 = vmul.f32 0.5, %v249
    %v251 = vsub.f32 1.5, %v250
    %v252 = vmul.f32 %v247, %v251
    %vm253 = vweird.f32 %v246
    %vm254 = vweird.f32 %v247
    %vm255 = vmor %vm253, %vm254
    %v256 = vsel %vm255, %v247, %v252
    %v257 = vmul.f32 %v240, %v256
    %v259 = vperm.slane %v226, 0
    %v261 = vmul.f32 %v257, %v259
    %v263 = vperm.slane %v227, 0
    %v265 = vadd.f32 %v261, %v263
    %v266 = vtanh.pop %v265
    %v267 = vpack.c.bf16 %v266, %v266
    %v268 = vld [vmem:[%s7] sm:$0xf]
    %v269 = vld [vmem:[%s7 + $0x4] sm:$0xf]
    %v270 = vld [vmem:[%s7 + $0x8] sm:$0xf]
    %v271 = vld [vmem:[%s7 + $0xc] sm:$0xf]
    %v272 = vld [vmem:[#allocation10] sm:$0x1]
    %v274 = vperm.slane %v272, 0
    %v280 = vunpack.c.l.b16 %v268
    %v281 = vunpack.c.l.b16 %v269
    %v282 = vunpack.c.l.b16 %v270
    %v283 = vunpack.c.l.b16 %v271
    %v284 = vpack.c.b16 %v281, %v280
    %v285 = vpack.c.b16 %v283, %v282
    %v289 = vsel %vm228, %v267, 0
    %291 = vmatpush.bf16.msra.mxu0 0
    %292 = vmatpush.bf16.msra.mxu0 0
    %293 = vmatpush.bf16.msra.mxu0 0
    %294 = vmatpush.bf16.msra.mxu0 0
    %295 = vmatpush.bf16.msra.mxu0 0
    %296 = vmatpush.bf16.msra.mxu0 0
    %297 = vmatpush.bf16.msra.mxu0 %v285
    %298 = vmatpush.bf16.msra.mxu0 %v284
    %299 = vmatmul.bf16.gmra.mxu0 %v289
    %v300 = vpop.f32.mrf.mxu0
    %v301 = vadd.f32 %v274, %v300
    %v302 = vpop.f32.mrf.mxu0
    %303 = vdwg.mxu0
    %v304 = vmax.f32 %v301, 0.0
    %v305 = vld [vmem:[%s9] sm:$0xf]
    %v306 = vld [vmem:[%s9 + $0x4] sm:$0xf]
    %v307 = vld [vmem:[%s10] sm:$0x1]
    %v309 = vperm.slane %v307, 0
    %v313 = vunpack.c.l.b16 %v305
    %v314 = vunpack.c.l.b16 %v306
    %v315 = vpack.c.b16 %v314, %v313
    %317 = vmatpush.bf16.msra.mxu0 0
    %318 = vmatpush.bf16.msra.mxu0 0
    %319 = vmatpush.bf16.msra.mxu0 0
    %320 = vmatpush.bf16.msra.mxu0 0
    %321 = vmatpush.bf16.msra.mxu0 0
    %322 = vmatpush.bf16.msra.mxu0 0
    %323 = vmatpush.bf16.msra.mxu0 0
    %324 = vmatpush.bf16.msra.mxu0 %v315
    %325 = vmatmul.bf16.gmra.mxu0 %v206
    %v326 = vpop.f32.mrf.mxu0
    %v327 = vadd.f32 %v309, %v326
    %v328 = vpop.f32.mrf.mxu0
    %329 = vdwg.mxu0
    %v330 = vld [vmem:[%s11] sm:$0x1]
    %v331 = vld [vmem:[%s12] sm:$0x1]
    %v332 = vsel %vm228, %v327, 0.0
    %333 = vadd.xlane.f32.xlu0 %v332
    %v334 = vpop.xlane.xlu0 %333
    %v335 = vmul.f32 %v334, %v238
    %v336 = vsub.f32 %v327, %v335
    %v337 = vmul.f32 %v336, %v336
    %v338 = vsel %vm228, %v337, 0.0
    %339 = vadd.xlane.f32.xlu0 %v338
    %v340 = vpop.xlane.xlu0 %339
    %v341 = vmul.f32 %v340, %v238
    %v342 = vadd.f32 %v341, 1e-05
    %v343 = vrsqrt.pop %v342
    %v344 = vmul.f32 %v343, %v342
    %v345 = vmul.f32 %v344, %v343
    %v346 = vmul.f32 0.5, %v345
    %v347 = vsub.f32 1.5, %v346
    %v348 = vmul.f32 %v343, %v347
    %vm349 = vweird.f32 %v342
    %vm350 = vweird.f32 %v343
    %vm351 = vmor %vm349, %vm350
    %v352 = vsel %vm351, %v343, %v348
    %v353 = vmul.f32 %v336, %v352
    %v355 = vperm.slane %v330, 0
    %v357 = vmul.f32 %v353, %v355
    %v359 = vperm.slane %v331, 0
    %v361 = vadd.f32 %v357, %v359
    %v362 = vtanh.pop %v361
    %v363 = vpack.c.bf16 %v362, %v362
    %v364 = vld [vmem:[%s13] sm:$0xf]
    %v365 = vld [vmem:[%s13 + $0x4] sm:$0xf]
    %v366 = vld [vmem:[%s13 + $0x8] sm:$0xf]
    %v367 = vld [vmem:[%s13 + $0xc] sm:$0xf]
    %v368 = vld [vmem:[%s14] sm:$0x1]
    %v370 = vperm.slane %v368, 0
    %v376 = vunpack.c.l.b16 %v364
    %v377 = vunpack.c.l.b16 %v365
    %v378 = vunpack.c.l.b16 %v366
    %v379 = vunpack.c.l.b16 %v367
    %v380 = vpack.c.b16 %v377, %v376
    %v381 = vpack.c.b16 %v379, %v378
    %v385 = vsel %vm228, %v363, 0
    %387 = vmatpush.bf16.msra.mxu0 0
    %388 = vmatpush.bf16.msra.mxu0 0
    %389 = vmatpush.bf16.msra.mxu0 0
    %390 = vmatpush.bf16.msra.mxu0 0
    %391 = vmatpush.bf16.msra.mxu0 0
    %392 = vmatpush.bf16.msra.mxu0 0
    %393 = vmatpush.bf16.msra.mxu0 %v381
    %394 = vmatpush.bf16.msra.mxu0 %v380
    %395 = vmatmul.bf16.gmra.mxu0 %v385
    %v396 = vpop.f32.mrf.mxu0
    %v397 = vadd.f32 %v370, %v396
    %v398 = vpop.f32.mrf.mxu0
    %399 = vdwg.mxu0
    %v400 = vmax.f32 %v397, 0.0
    %v401 = vpack.c.bf16 %v400, %v400
    %v402 = vld [vmem:[#allocation11] sm:$0xf]
    %v403 = vld [vmem:[#allocation11 + $0x4] sm:$0xf]
    %v404 = vpack.c.bf16 %v304, %v304
    %v405 = vld [vmem:[#allocation13] sm:$0xf]
    %v406 = vld [vmem:[#allocation13 + $0x4] sm:$0xf]
    %v409 = vunpack.c.l.b16 %v405
    %v410 = vunpack.c.l.b16 %v406
    %v411 = vpack.c.b16 %v410, %v409
    %v414 = vsel %vm182, %v404, 0
    %416 = vmatpush.bf16.msra.mxu0 0
    %417 = vmatpush.bf16.msra.mxu0 0
    %418 = vmatpush.bf16.msra.mxu0 0
    %419 = vmatpush.bf16.msra.mxu0 0
    %420 = vmatpush.bf16.msra.mxu0 0
    %421 = vmatpush.bf16.msra.mxu0 0
    %422 = vmatpush.bf16.msra.mxu0 0
    %423 = vmatpush.bf16.msra.mxu0 %v411
    %424 = vmatmul.bf16.gmra.mxu0 %v414
    %v425 = vpop.f32.mrf.mxu0
    %v426 = vadd.f32 0.0, %v425
    %v427 = vpop.f32.mrf.mxu0
    %428 = vdwg.mxu0
    %v431 = vunpack.c.l.b16 %v402
    %v432 = vunpack.c.l.b16 %v403
    %v433 = vpack.c.b16 %v432, %v431
    %v436 = vsel %vm182, %v401, 0
    %438 = vmatpush.bf16.msra.mxu0 0
    %439 = vmatpush.bf16.msra.mxu0 0
    %440 = vmatpush.bf16.msra.mxu0 0
    %441 = vmatpush.bf16.msra.mxu0 0
    %442 = vmatpush.bf16.msra.mxu0 0
    %443 = vmatpush.bf16.msra.mxu0 0
    %444 = vmatpush.bf16.msra.mxu0 0
    %445 = vmatpush.bf16.msra.mxu0 %v433
    %446 = vmatmul.bf16.gmra.mxu0 %v436
    %v447 = vpop.f32.mrf.mxu0
    %v448 = vadd.f32 %v426, %v447
    %v449 = vpop.f32.mrf.mxu0
    %450 = vdwg.mxu0
    %v451 = vld [vmem:[%s17] sm:$0x1]
    %v453 = vperm.slane %v451, 0
    %v455 = vadd.f32 %v448, %v453
    %v456 = vmax.f32 %v455, 0.0
    %v457 = vpack.c.bf16 %v456, %v456
    %v458 = vld [vmem:[%s18] sm:$0xf]
    %v459 = vld [vmem:[%s18 + $0x4] sm:$0xf]
    %v460 = vld [vmem:[%s18 + $0x8] sm:$0xf]
    %v461 = vld [vmem:[%s18 + $0xc] sm:$0xf]
    %v462 = vld [vmem:[%s19] sm:$0x1]
    %v464 = vperm.slane %v462, 0
    %v470 = vunpack.c.l.b16 %v458
    %v471 = vunpack.c.l.b16 %v459
    %v472 = vunpack.c.l.b16 %v460
    %v473 = vunpack.c.l.b16 %v461
    %v474 = vpack.c.b16 %v471, %v470
    %v475 = vpack.c.b16 %v473, %v472
    %v479 = vsel %vm228, %v457, 0
    %481 = vmatpush.bf16.msra.mxu0 0
    %482 = vmatpush.bf16.msra.mxu0 0
    %483 = vmatpush.bf16.msra.mxu0 0
    %484 = vmatpush.bf16.msra.mxu0 0
    %485 = vmatpush.bf16.msra.mxu0 0
    %486 = vmatpush.bf16.msra.mxu0 0
    %487 = vmatpush.bf16.msra.mxu0 %v475
    %488 = vmatpush.bf16.msra.mxu0 %v474
    %489 = vmatmul.bf16.gmra.mxu0 %v479
    %v490 = vpop.f32.mrf.mxu0
    %v491 = vadd.f32 %v464, %v490
    %v492 = vpop.f32.mrf.mxu0
    %493 = vdwg.mxu0
    %v494 = vtanh.pop %v491
    %495 = vst [vmem:[#allocation14] sm:$0xff] %v494
    // Predicated region
    $region110: #{tpu_custom_call.1} parent=1 // pred_check
      _
    $region111: #{tpu_custom_call.1} parent=1 // pred_check_branch
      %497 = sbr.rel (0) target = $region113
    $region112: #{tpu_custom_call.1} parent=1 // pred_region
      %499 = vsyncadd [#allocation4], 0
      %s501 = sshll.u32 [#allocation14], 4
      %s502 = int_to_ptr.vmem [resolvable:$true] %s501
      %s503 = sshll.u32 %s20, 4
      %s504 = int_to_ptr.hbm [resolvable:$true] %s503
      %506 = dma.vmem_to_hbm [thread:$0]  %s502, 128, %s504, [#allocation4]
    $region113: #{tpu_custom_call.1} parent=1 // pred_fallthru
      _
    // Predicated region
    $region114: #{tpu_custom_call.1} parent=1 // pred_check
      _
    $region115: #{tpu_custom_call.1} parent=1 // pred_check_branch
      %508 = sbr.rel (0) target = $region117
    $region116: #{tpu_custom_call.1} parent=1 // pred_region
      %510 = dma.done [#allocation4], 128
    $region117: #{tpu_custom_call.1} parent=1 // pred_fallthru
      _
    %511 = vsyncpa [#allocation3], 1
    %512 = vsyncpa [#allocation6], 1
    %513 = vsyncpa [#allocation9], 1
    %514 = vsyncpa [#allocation12], 1
    %515 = vsyncpa [#allocation4], 1

</llo_original>
